<compile_context>
chip_gen: v7x
topology: tpu7x:2x2x1
jax: 0.10.0
libtpu: 0.0.40
codegen_flags: <defaults>
</compile_context>

<pallas_src>
import jax
import jax.numpy as jnp
from jax.experimental import pallas as pl
from jax.experimental.pallas import tpu as pltpu

INPUT_SIZE = 2
DIMS = [INPUT_SIZE, 50, 70, 150, 100, 50, 1]     # layer widths
_K1_PAD = 8                                      # layer-1 K padded 2 -> 8 (sublane aligned)
_MAX_BATCH_TILE = 2048                           # rows per grid step cap (multiple of 128)


def mlp_kernel(x_ref,
               w1, b1, w2, b2, w3, b3, w4, b4, w5, b5, w6, b6,
               o_ref):
    """One grid step: all six layers for a (features, T) activation slab."""
    h = x_ref[...].astype(jnp.float32)                       # (8, T); rows 2..7 are zero

    def dense_relu(w_ref, b_ref, h):
        z = jnp.dot(w_ref[...], h, preferred_element_type=jnp.float32) + b_ref[...]
        return jnp.maximum(z, 0.0)

    h = dense_relu(w1, b1, h)                                # (50, T)
    h = dense_relu(w2, b2, h)                                # (70, T)
    h = dense_relu(w3, b3, h)                                # (150, T)
    h = dense_relu(w4, b4, h)                                # (100, T)
    h = dense_relu(w5, b5, h)                                # (50, T)

    # Layer 6 (out = 1): w6 holds the single output row replicated over 8
    # sublanes, so this is a plain (8, 50) @ (50, T) matmul; row 0 is the
    # answer and the batch stays on the lane axis for the output store.
    z6 = jnp.dot(w6[...], h, preferred_element_type=jnp.float32)       # (8, T)
    o_ref[...] = jax.nn.sigmoid(z6[0:1, :] + b6[...]).astype(o_ref.dtype)


def _round_up(a, b):
    return ((a + b - 1) // b) * b


def _choose_batch_tile(n, max_tile=_MAX_BATCH_TILE):
    """Smallest lane-dense tile for tiny batches; >= 2 grid steps when possible."""
    n128 = _round_up(max(n, 1), 128)
    if n128 <= 128:
        return 128
    half = _round_up((n128 + 1) // 2, 128)       # aim for >= 2 steps (v7x: 2 TCs)
    return min(max_tile, half)


def init_params(key):
    """torch.nn.Linear-style init: W (out, in), b (out,), U[-1/sqrt(fan_in), +)."""
    params = []
    for i in range(6):
        fan_in, fan_out = DIMS[i], DIMS[i + 1]
        key, kw, kb = jax.random.split(key, 3)
        bound = 1.0 / jnp.sqrt(jnp.float32(fan_in))
        w = jax.random.uniform(kw, (fan_out, fan_in), jnp.float32, -bound, bound)
        b = jax.random.uniform(kb, (fan_out,), jnp.float32, -bound, bound)
        params += [w, b]
    return params


def mlp_forward(x, params):
    n, d = x.shape
    assert d == INPUT_SIZE

    batch_tile = _choose_batch_tile(n)
    n_pad = _round_up(n, batch_tile)
    num_tiles = n_pad // batch_tile

    # Batch on the lane axis: x -> (8, n_pad) with 6 zero feature rows and
    # zero-padded batch columns (computed then cropped).
    x_t = jnp.pad(x.astype(jnp.float32).T,
                  ((0, _K1_PAD - INPUT_SIZE), (0, n_pad - n)))

    # Repack params: weights stay (out, in) (layer-1 K padded 2 -> 8), biases
    # become (out, 1) columns, last weight row replicated over 8 sublanes.
    w1, b1, w2, b2, w3, b3, w4, b4, w5, b5, w6, b6 = params
    kparams = [
        jnp.pad(w1, ((0, 0), (0, _K1_PAD - INPUT_SIZE))), b1.reshape(-1, 1),
        w2, b2.reshape(-1, 1),
        w3, b3.reshape(-1, 1),
        w4, b4.reshape(-1, 1),
        w5, b5.reshape(-1, 1),
        jnp.tile(w6.reshape(1, -1), (8, 1)), b6.reshape(1, 1),
    ]

    x_spec = pl.BlockSpec((_K1_PAD, batch_tile), lambda i: (0, i))
    o_spec = pl.BlockSpec((1, batch_tile), lambda i: (0, i))        # lane-dense slab
    p_specs = [pl.BlockSpec(p.shape, lambda i: (0, 0)) for p in kparams]

    out = pl.pallas_call(
        mlp_kernel,
        out_shape=jax.ShapeDtypeStruct((1, n_pad), jnp.float32),
        grid_spec=pl.GridSpec(
            grid=(num_tiles,),
            in_specs=[x_spec] + p_specs,
            out_specs=o_spec,
        ),
        compiler_params=pltpu.CompilerParams(
            dimension_semantics=("parallel",)),
    )(x_t, *kparams)

    return out.reshape(n_pad, 1)[:n]


def mlp_reference(x, params):
    h = x
    for i in range(5):
        h = jnp.maximum(h @ params[2 * i].T + params[2 * i + 1], 0.0)
    return jax.nn.sigmoid(h @ params[10].T + params[11])


if __name__ == "__main__":
    key = jax.random.PRNGKey(0)
    kx, kp = jax.random.split(key)
    params = init_params(kp)

    for batch in (16, 300):          # single-tile and multi-tile (padded) paths
        kx, kcur = jax.random.split(kx)
        x = jax.random.normal(kcur, (batch, INPUT_SIZE), jnp.float32)

        out = jax.block_until_ready(mlp_forward(x, params))
        ref = mlp_reference(x, params)

        assert out.shape == (batch, 1)
        assert jnp.allclose(out, ref, atol=1e-5, rtol=1e-5), (
            "max abs err = %g" % float(jnp.max(jnp.abs(out - ref))))

    print("KERNEL_OK")
</pallas_src>

<mosaic_0001>
module attributes {stable_mosaic.version = 11 : i64} {
  func.func @mlp_kernel(%arg0: i32, %arg1: memref<8x128xf32, #tpu.memory_space<vmem>>, %arg2: memref<50x8xf32, #tpu.memory_space<vmem>>, %arg3: memref<50x1xf32, #tpu.memory_space<vmem>>, %arg4: memref<70x50xf32, #tpu.memory_space<vmem>>, %arg5: memref<70x1xf32, #tpu.memory_space<vmem>>, %arg6: memref<150x70xf32, #tpu.memory_space<vmem>>, %arg7: memref<150x1xf32, #tpu.memory_space<vmem>>, %arg8: memref<100x150xf32, #tpu.memory_space<vmem>>, %arg9: memref<100x1xf32, #tpu.memory_space<vmem>>, %arg10: memref<50x100xf32, #tpu.memory_space<vmem>>, %arg11: memref<50x1xf32, #tpu.memory_space<vmem>>, %arg12: memref<8x50xf32, #tpu.memory_space<vmem>>, %arg13: memref<1x1xf32, #tpu.memory_space<vmem>>, %arg14: memref<1x128xf32, #tpu.memory_space<vmem>>) attributes {dimension_semantics = [#tpu.dimension_semantics<parallel>], iteration_bounds = array<i64: 1>, scalar_prefetch = 0 : i64, scratch_operands = 0 : i64, tpu.core_type = #tpu.core_type<tc>, window_params = [{transform_indices = @transform_0, window_bounds = array<i64: 8, 128>}, {pipeline_mode = #tpu.pipeline_mode<synchronous>, transform_indices = @transform_1, window_bounds = array<i64: 50, 8>}, {pipeline_mode = #tpu.pipeline_mode<synchronous>, transform_indices = @transform_2, window_bounds = array<i64: 50, 1>}, {pipeline_mode = #tpu.pipeline_mode<synchronous>, transform_indices = @transform_3, window_bounds = array<i64: 70, 50>}, {pipeline_mode = #tpu.pipeline_mode<synchronous>, transform_indices = @transform_4, window_bounds = array<i64: 70, 1>}, {pipeline_mode = #tpu.pipeline_mode<synchronous>, transform_indices = @transform_5, window_bounds = array<i64: 150, 70>}, {pipeline_mode = #tpu.pipeline_mode<synchronous>, transform_indices = @transform_6, window_bounds = array<i64: 150, 1>}, {pipeline_mode = #tpu.pipeline_mode<synchronous>, transform_indices = @transform_7, window_bounds = array<i64: 100, 150>}, {pipeline_mode = #tpu.pipeline_mode<synchronous>, transform_indices = @transform_8, window_bounds = array<i64: 100, 1>}, {pipeline_mode = #tpu.pipeline_mode<synchronous>, transform_indices = @transform_9, window_bounds = array<i64: 50, 100>}, {pipeline_mode = #tpu.pipeline_mode<synchronous>, transform_indices = @transform_10, window_bounds = array<i64: 50, 1>}, {pipeline_mode = #tpu.pipeline_mode<synchronous>, transform_indices = @transform_11, window_bounds = array<i64: 8, 50>}, {pipeline_mode = #tpu.pipeline_mode<synchronous>, transform_indices = @transform_12, window_bounds = array<i64: 1, 1>}, {transform_indices = @transform_13, window_bounds = array<i64: 1, 128>}]} {
    %c0 = arith.constant 0 : index
    %c0_0 = arith.constant 0 : index
    %0 = vector.load %arg1[%c0, %c0_0] : memref<8x128xf32, #tpu.memory_space<vmem>>, vector<8x128xf32>
    %c0_1 = arith.constant 0 : index
    %c0_2 = arith.constant 0 : index
    %1 = vector.load %arg2[%c0_1, %c0_2] : memref<50x8xf32, #tpu.memory_space<vmem>>, vector<50x8xf32>
    %cst = arith.constant dense<0.000000e+00> : vector<50x128xf32>
    %2 = tpu.matmul %1, %0, %cst {dimension_numbers = #tpu.dot_dimension_numbers<[1], [0], [0], [1], [0, 0, 1, 1], [], []>} : vector<50x8xf32>, vector<8x128xf32>, vector<50x128xf32> -> vector<50x128xf32>
    %c0_3 = arith.constant 0 : index
    %c0_4 = arith.constant 0 : index
    %3 = vector.load %arg3[%c0_3, %c0_4] : memref<50x1xf32, #tpu.memory_space<vmem>>, vector<50x1xf32>
    %4 = vector.broadcast %3 : vector<50x1xf32> to vector<50x128xf32>
    %5 = arith.addf %2, %4 : vector<50x128xf32>
    %cst_5 = arith.constant 0.000000e+00 : f32
    %6 = vector.broadcast %cst_5 : f32 to vector<50x128xf32>
    %7 = arith.maximumf %5, %6 : vector<50x128xf32>
    %c0_6 = arith.constant 0 : index
    %c0_7 = arith.constant 0 : index
    %8 = vector.load %arg4[%c0_6, %c0_7] : memref<70x50xf32, #tpu.memory_space<vmem>>, vector<70x50xf32>
    %cst_8 = arith.constant dense<0.000000e+00> : vector<70x128xf32>
    %9 = tpu.matmul %8, %7, %cst_8 {dimension_numbers = #tpu.dot_dimension_numbers<[1], [0], [0], [1], [0, 0, 1, 1], [], []>} : vector<70x50xf32>, vector<50x128xf32>, vector<70x128xf32> -> vector<70x128xf32>
    %c0_9 = arith.constant 0 : index
    %c0_10 = arith.constant 0 : index
    %10 = vector.load %arg5[%c0_9, %c0_10] : memref<70x1xf32, #tpu.memory_space<vmem>>, vector<70x1xf32>
    %11 = vector.broadcast %10 : vector<70x1xf32> to vector<70x128xf32>
    %12 = arith.addf %9, %11 : vector<70x128xf32>
    %cst_11 = arith.constant 0.000000e+00 : f32
    %13 = vector.broadcast %cst_11 : f32 to vector<70x128xf32>
    %14 = arith.maximumf %12, %13 : vector<70x128xf32>
    %c0_12 = arith.constant 0 : index
    %c0_13 = arith.constant 0 : index
    %15 = vector.load %arg6[%c0_12, %c0_13] : memref<150x70xf32, #tpu.memory_space<vmem>>, vector<150x70xf32>
    %cst_14 = arith.constant dense<0.000000e+00> : vector<150x128xf32>
    %16 = tpu.matmul %15, %14, %cst_14 {dimension_numbers = #tpu.dot_dimension_numbers<[1], [0], [0], [1], [0, 0, 1, 1], [], []>} : vector<150x70xf32>, vector<70x128xf32>, vector<150x128xf32> -> vector<150x128xf32>
    %c0_15 = arith.constant 0 : index
    %c0_16 = arith.constant 0 : index
    %17 = vector.load %arg7[%c0_15, %c0_16] : memref<150x1xf32, #tpu.memory_space<vmem>>, vector<150x1xf32>
    %18 = vector.broadcast %17 : vector<150x1xf32> to vector<150x128xf32>
    %19 = arith.addf %16, %18 : vector<150x128xf32>
    %cst_17 = arith.constant 0.000000e+00 : f32
    %20 = vector.broadcast %cst_17 : f32 to vector<150x128xf32>
    %21 = arith.maximumf %19, %20 : vector<150x128xf32>
    %c0_18 = arith.constant 0 : index
    %c0_19 = arith.constant 0 : index
    %22 = vector.load %arg8[%c0_18, %c0_19] : memref<100x150xf32, #tpu.memory_space<vmem>>, vector<100x150xf32>
    %cst_20 = arith.constant dense<0.000000e+00> : vector<100x128xf32>
    %23 = tpu.matmul %22, %21, %cst_20 {dimension_numbers = #tpu.dot_dimension_numbers<[1], [0], [0], [1], [0, 0, 1, 1], [], []>} : vector<100x150xf32>, vector<150x128xf32>, vector<100x128xf32> -> vector<100x128xf32>
    %c0_21 = arith.constant 0 : index
    %c0_22 = arith.constant 0 : index
    %24 = vector.load %arg9[%c0_21, %c0_22] : memref<100x1xf32, #tpu.memory_space<vmem>>, vector<100x1xf32>
    %25 = vector.broadcast %24 : vector<100x1xf32> to vector<100x128xf32>
    %26 = arith.addf %23, %25 : vector<100x128xf32>
    %cst_23 = arith.constant 0.000000e+00 : f32
    %27 = vector.broadcast %cst_23 : f32 to vector<100x128xf32>
    %28 = arith.maximumf %26, %27 : vector<100x128xf32>
    %c0_24 = arith.constant 0 : index
    %c0_25 = arith.constant 0 : index
    %29 = vector.load %arg10[%c0_24, %c0_25] : memref<50x100xf32, #tpu.memory_space<vmem>>, vector<50x100xf32>
    %cst_26 = arith.constant dense<0.000000e+00> : vector<50x128xf32>
    %30 = tpu.matmul %29, %28, %cst_26 {dimension_numbers = #tpu.dot_dimension_numbers<[1], [0], [0], [1], [0, 0, 1, 1], [], []>} : vector<50x100xf32>, vector<100x128xf32>, vector<50x128xf32> -> vector<50x128xf32>
    %c0_27 = arith.constant 0 : index
    %c0_28 = arith.constant 0 : index
    %31 = vector.load %arg11[%c0_27, %c0_28] : memref<50x1xf32, #tpu.memory_space<vmem>>, vector<50x1xf32>
    %32 = vector.broadcast %31 : vector<50x1xf32> to vector<50x128xf32>
    %33 = arith.addf %30, %32 : vector<50x128xf32>
    %cst_29 = arith.constant 0.000000e+00 : f32
    %34 = vector.broadcast %cst_29 : f32 to vector<50x128xf32>
    %35 = arith.maximumf %33, %34 : vector<50x128xf32>
    %c0_30 = arith.constant 0 : index
    %c0_31 = arith.constant 0 : index
    %36 = vector.load %arg12[%c0_30, %c0_31] : memref<8x50xf32, #tpu.memory_space<vmem>>, vector<8x50xf32>
    %cst_32 = arith.constant dense<0.000000e+00> : vector<8x128xf32>
    %37 = tpu.matmul %36, %35, %cst_32 {dimension_numbers = #tpu.dot_dimension_numbers<[1], [0], [0], [1], [0, 0, 1, 1], [], []>} : vector<8x50xf32>, vector<50x128xf32>, vector<8x128xf32> -> vector<8x128xf32>
    %38 = vector.extract_strided_slice %37 {offsets = [0, 0], sizes = [1, 128], strides = [1, 1]} : vector<8x128xf32> to vector<1x128xf32>
    %c0_33 = arith.constant 0 : index
    %c0_34 = arith.constant 0 : index
    %39 = vector.load %arg13[%c0_33, %c0_34] : memref<1x1xf32, #tpu.memory_space<vmem>>, vector<1x1xf32>
    %40 = vector.broadcast %39 : vector<1x1xf32> to vector<1x128xf32>
    %41 = arith.addf %38, %40 : vector<1x128xf32>
    %42 = arith.negf %41 : vector<1x128xf32>
    %43 = math.exp %42 : vector<1x128xf32>
    %cst_35 = arith.constant 1.000000e+00 : f32
    %44 = vector.broadcast %cst_35 : f32 to vector<1x128xf32>
    %45 = arith.addf %44, %43 : vector<1x128xf32>
    %46 = arith.divf %44, %45 : vector<1x128xf32>
    %c0_36 = arith.constant 0 : index
    %c0_37 = arith.constant 0 : index
    %47 = vector.load %arg14[%c0_36, %c0_37] : memref<1x128xf32, #tpu.memory_space<vmem>>, vector<1x128xf32>
    tpu.vector_store %arg14[%c0_36, %c0_37], %46 {strides = array<i32>} : memref<1x128xf32, #tpu.memory_space<vmem>>, vector<1x128xf32>,
    return
  }
  func.func @transform_0(%arg0: i32) -> (i32, i32) {
    %c0_i32 = arith.constant 0 : i32
    %c0_i32_0 = arith.constant 0 : i32
    return %c0_i32, %arg0 : i32, i32
  }
  func.func @transform_1(%arg0: i32) -> (i32, i32) {
    %c0_i32 = arith.constant 0 : i32
    %c0_i32_0 = arith.constant 0 : i32
    %c0_i32_1 = arith.constant 0 : i32
    return %c0_i32, %c0_i32_0 : i32, i32
  }
  func.func @transform_2(%arg0: i32) -> (i32, i32) {
    %c0_i32 = arith.constant 0 : i32
    %c0_i32_0 = arith.constant 0 : i32
    %c0_i32_1 = arith.constant 0 : i32
    return %c0_i32, %c0_i32_0 : i32, i32
  }
  func.func @transform_3(%arg0: i32) -> (i32, i32) {
    %c0_i32 = arith.constant 0 : i32
    %c0_i32_0 = arith.constant 0 : i32
    %c0_i32_1 = arith.constant 0 : i32
    return %c0_i32, %c0_i32_0 : i32, i32
  }
  func.func @transform_4(%arg0: i32) -> (i32, i32) {
    %c0_i32 = arith.constant 0 : i32
    %c0_i32_0 = arith.constant 0 : i32
    %c0_i32_1 = arith.constant 0 : i32
    return %c0_i32, %c0_i32_0 : i32, i32
  }
  func.func @transform_5(%arg0: i32) -> (i32, i32) {
    %c0_i32 = arith.constant 0 : i32
    %c0_i32_0 = arith.constant 0 : i32
    %c0_i32_1 = arith.constant 0 : i32
    return %c0_i32, %c0_i32_0 : i32, i32
  }
  func.func @transform_6(%arg0: i32) -> (i32, i32) {
    %c0_i32 = arith.constant 0 : i32
    %c0_i32_0 = arith.constant 0 : i32
    %c0_i32_1 = arith.constant 0 : i32
    return %c0_i32, %c0_i32_0 : i32, i32
  }
  func.func @transform_7(%arg0: i32) -> (i32, i32) {
    %c0_i32 = arith.constant 0 : i32
    %c0_i32_0 = arith.constant 0 : i32
    %c0_i32_1 = arith.constant 0 : i32
    return %c0_i32, %c0_i32_0 : i32, i32
  }
  func.func @transform_8(%arg0: i32) -> (i32, i32) {
    %c0_i32 = arith.constant 0 : i32
    %c0_i32_0 = arith.constant 0 : i32
    %c0_i32_1 = arith.constant 0 : i32
    return %c0_i32, %c0_i32_0 : i32, i32
  }
  func.func @transform_9(%arg0: i32) -> (i32, i32) {
    %c0_i32 = arith.constant 0 : i32
    %c0_i32_0 = arith.constant 0 : i32
    %c0_i32_1 = arith.constant 0 : i32
    return %c0_i32, %c0_i32_0 : i32, i32
  }
  func.func @transform_10(%arg0: i32) -> (i32, i32) {
    %c0_i32 = arith.constant 0 : i32
    %c0_i32_0 = arith.constant 0 : i32
    %c0_i32_1 = arith.constant 0 : i32
    return %c0_i32, %c0_i32_0 : i32, i32
  }
  func.func @transform_11(%arg0: i32) -> (i32, i32) {
    %c0_i32 = arith.constant 0 : i32
    %c0_i32_0 = arith.constant 0 : i32
    %c0_i32_1 = arith.constant 0 : i32
    return %c0_i32, %c0_i32_0 : i32, i32
  }
  func.func @transform_12(%arg0: i32) -> (i32, i32) {
    %c0_i32 = arith.constant 0 : i32
    %c0_i32_0 = arith.constant 0 : i32
    %c0_i32_1 = arith.constant 0 : i32
    return %c0_i32, %c0_i32_0 : i32, i32
  }
  func.func @transform_13(%arg0: i32) -> (i32, i32) {
    %c0_i32 = arith.constant 0 : i32
    %c0_i32_0 = arith.constant 0 : i32
    return %c0_i32, %arg0 : i32, i32
  }
}

</mosaic_0001>

<llo_original>
// kernel: tpu_custom_call.1
$region0: #{tpu_custom_call.1}
  #allocation0 [shape = 'u32[]', space=smem, size = 0x4, offset = 0x4, fixed_abs, tag = 'smem constant byte address 0x4 - core index']
  #allocation1 [shape = 'u32[144,128]{1,0:T(1,128)}', space=vmem, size = 0x12000, scoped, tag = 'internal scratch']
  #allocation2 [shape = 'f32[1,1]{1,0:T(1,128)S(1)}', space=vmem, size = 0x200, scoped, tag = 'scoped memory for tpu_custom_call.1']
  %s0 = inlined_call_operand.vmem [shape: f32[8,128], index: 0, kind: input, shape index: {}]
  %s1 = inlined_call_operand.vmem [shape: f32[50,8], index: 1, kind: input, shape index: {}]
  %s2 = inlined_call_operand.vmem [shape: f32[50,1], index: 2, kind: input, shape index: {}]
  %s3 = inlined_call_operand.vmem [shape: f32[70,50], index: 3, kind: input, shape index: {}]
  %s4 = inlined_call_operand.vmem [shape: f32[70,1], index: 4, kind: input, shape index: {}]
  %s5 = inlined_call_operand.vmem [shape: f32[150,70], index: 5, kind: input, shape index: {}]
  %s6 = inlined_call_operand.vmem [shape: f32[150,1], index: 6, kind: input, shape index: {}]
  %s7 = inlined_call_operand.vmem [shape: f32[100,150], index: 7, kind: input, shape index: {}]
  %s8 = inlined_call_operand.vmem [shape: f32[100,1], index: 8, kind: input, shape index: {}]
  %s9 = inlined_call_operand.vmem [shape: f32[50,100], index: 9, kind: input, shape index: {}]
  %s10 = inlined_call_operand.vmem [shape: f32[50,1], index: 10, kind: input, shape index: {}]
  %s11 = inlined_call_operand.vmem [shape: f32[8,50], index: 11, kind: input, shape index: {}]
  %s12 = inlined_call_operand.<no memory space> [shape: f32[1,1], index: 12, kind: input, shape index: {}]
  %s13 = inlined_call_operand.hbm [shape: f32[1,128], index: 13, kind: output, shape index: {}]
  %s14 = sld [smem:[#allocation0]]
  $region62: #{tpu_custom_call.1} parent=0
    _
  %s16 = ssub.s32 1, %s14
  %s17 = scalar_select 0, %s16, %s14
  %v18 = vstv %s12
  %19 = vst [vmem:[#allocation2] sm:$0x1] %v18
  $region1: #{tpu_custom_call.1} parent=0
    #allocation3 [shape = 'u8[512]{0}', space=vmem, size = 0x400, scoped, tag = 'output window, operand 0, single buffered']
    #allocation4 [shape = 's32[1]{0}', space=sflag, size = 0x4, scoped, tag = 'scoped memory for tpu_custom_call.1']
    %20 = vsyncpa [#allocation4], 0
    // Predicated region
    $region2: #{tpu_custom_call.1} parent=1 // pred_check
      _
    $region3: #{tpu_custom_call.1} parent=1 // pred_check_branch
      %22 = sbr.rel (0) target = $region5
    $region4: #{tpu_custom_call.1} parent=1 // pred_region
      _
    $region5: #{tpu_custom_call.1} parent=1 // pred_fallthru
      _
    // Predicated region
    $region6: #{tpu_custom_call.1} parent=1 // pred_check
      _
    $region7: #{tpu_custom_call.1} parent=1 // pred_check_branch
      %24 = sbr.rel (0) target = $region9
    $region8: #{tpu_custom_call.1} parent=1 // pred_region
      _
    $region9: #{tpu_custom_call.1} parent=1 // pred_fallthru
      _
    // Predicated region
    $region10: #{tpu_custom_call.1} parent=1 // pred_check
      _
    $region11: #{tpu_custom_call.1} parent=1 // pred_check_branch
      %26 = sbr.rel (0) target = $region13
    $region12: #{tpu_custom_call.1} parent=1 // pred_region
      _
    $region13: #{tpu_custom_call.1} parent=1 // pred_fallthru
      _
    // Predicated region
    $region14: #{tpu_custom_call.1} parent=1 // pred_check
      _
    $region15: #{tpu_custom_call.1} parent=1 // pred_check_branch
      %28 = sbr.rel (0) target = $region17
    $region16: #{tpu_custom_call.1} parent=1 // pred_region
      _
    $region17: #{tpu_custom_call.1} parent=1 // pred_fallthru
      _
    // Predicated region
    $region18: #{tpu_custom_call.1} parent=1 // pred_check
      _
    $region19: #{tpu_custom_call.1} parent=1 // pred_check_branch
      %30 = sbr.rel (0) target = $region21
    $region20: #{tpu_custom_call.1} parent=1 // pred_region
      _
    $region21: #{tpu_custom_call.1} parent=1 // pred_fallthru
      _
    // Predicated region
    $region22: #{tpu_custom_call.1} parent=1 // pred_check
      _
    $region23: #{tpu_custom_call.1} parent=1 // pred_check_branch
      %32 = sbr.rel (0) target = $region25
    $region24: #{tpu_custom_call.1} parent=1 // pred_region
      _
    $region25: #{tpu_custom_call.1} parent=1 // pred_fallthru
      _
    // Predicated region
    $region26: #{tpu_custom_call.1} parent=1 // pred_check
      _
    $region27: #{tpu_custom_call.1} parent=1 // pred_check_branch
      %34 = sbr.rel (0) target = $region29
    $region28: #{tpu_custom_call.1} parent=1 // pred_region
      _
    $region29: #{tpu_custom_call.1} parent=1 // pred_fallthru
      _
    // Predicated region
    $region30: #{tpu_custom_call.1} parent=1 // pred_check
      _
    $region31: #{tpu_custom_call.1} parent=1 // pred_check_branch
      %36 = sbr.rel (0) target = $region33
    $region32: #{tpu_custom_call.1} parent=1 // pred_region
      _
    $region33: #{tpu_custom_call.1} parent=1 // pred_fallthru
      _
    // Predicated region
    $region34: #{tpu_custom_call.1} parent=1 // pred_check
      _
    $region35: #{tpu_custom_call.1} parent=1 // pred_check_branch
      %38 = sbr.rel (0) target = $region37
    $region36: #{tpu_custom_call.1} parent=1 // pred_region
      _
    $region37: #{tpu_custom_call.1} parent=1 // pred_fallthru
      _
    // Predicated region
    $region38: #{tpu_custom_call.1} parent=1 // pred_check
      _
    $region39: #{tpu_custom_call.1} parent=1 // pred_check_branch
      %40 = sbr.rel (0) target = $region41
    $region40: #{tpu_custom_call.1} parent=1 // pred_region
      _
    $region41: #{tpu_custom_call.1} parent=1 // pred_fallthru
      _
    // Predicated region
    $region42: #{tpu_custom_call.1} parent=1 // pred_check
      _
    $region43: #{tpu_custom_call.1} parent=1 // pred_check_branch
      %42 = sbr.rel (0) target = $region45
    $region44: #{tpu_custom_call.1} parent=1 // pred_region
      _
    $region45: #{tpu_custom_call.1} parent=1 // pred_fallthru
      _
    // Predicated region
    $region46: #{tpu_custom_call.1} parent=1 // pred_check
      _
    $region47: #{tpu_custom_call.1} parent=1 // pred_check_branch
      %44 = sbr.rel (0) target = $region49
    $region48: #{tpu_custom_call.1} parent=1 // pred_region
      _
    $region49: #{tpu_custom_call.1} parent=1 // pred_fallthru
      _
    // Predicated region
    $region50: #{tpu_custom_call.1} parent=1 // pred_check
      _
    $region51: #{tpu_custom_call.1} parent=1 // pred_check_branch
      %46 = sbr.rel (0) target = $region53
    $region52: #{tpu_custom_call.1} parent=1 // pred_region
      _
    $region53: #{tpu_custom_call.1} parent=1 // pred_fallthru
      _
    %v47 = vld [vmem:[%s0] sm:$0xff]
    %v48 = vld [vmem:[%s1] sm:$0xff]
    %v49 = vld [vmem:[%s1 + $0x8] sm:$0xff]
    %v50 = vld [vmem:[%s1 + $0x10] sm:$0xff]
    %v51 = vld [vmem:[%s1 + $0x18] sm:$0xff]
    %v52 = vld [vmem:[%s1 + $0x20] sm:$0xff]
    %v53 = vld [vmem:[%s1 + $0x28] sm:$0xff]
    %v54 = vld [vmem:[%s1 + $0x30] sm:$0x3]
    %v55 = vld [vmem:[%s2] sm:$0xff]
    %v56 = vld [vmem:[%s2 + $0x8] sm:$0xff]
    %v57 = vld [vmem:[%s2 + $0x10] sm:$0xff]
    %v58 = vld [vmem:[%s2 + $0x18] sm:$0xff]
    %v59 = vld [vmem:[%s2 + $0x20] sm:$0xff]
    %v60 = vld [vmem:[%s2 + $0x28] sm:$0xff]
    %v61 = vld [vmem:[%s2 + $0x30] sm:$0x3]
    %63 = vset.pattern.permute.xlu0 0
    %64 = vperm.xlu0 %63, %v55
    %v65 = vpop.permute.xlu0 %64
    %68 = vset.pattern.permute.xlu0 0
    %69 = vperm.xlu0 %68, %v56
    %v70 = vpop.permute.xlu0 %69
    %73 = vset.pattern.permute.xlu0 0
    %74 = vperm.xlu0 %73, %v57
    %v75 = vpop.permute.xlu0 %74
    %78 = vset.pattern.permute.xlu0 0
    %79 = vperm.xlu0 %78, %v58
    %v80 = vpop.permute.xlu0 %79
    %83 = vset.pattern.permute.xlu0 0
    %84 = vperm.xlu0 %83, %v59
    %v85 = vpop.permute.xlu0 %84
    %88 = vset.pattern.permute.xlu0 0
    %89 = vperm.xlu0 %88, %v60
    %v90 = vpop.permute.xlu0 %89
    %93 = vset.pattern.permute.xlu0 0
    %94 = vperm.xlu0 %93, %v61
    %v95 = vpop.permute.xlu0 %94
    %vm97 = vcmask 64512
    %v99 = vsel %vm97, %v48, 0
    %v102 = vsel %vm97, %v49, 0
    %v105 = vsel %vm97, %v50, 0
    %v108 = vsel %vm97, %v51, 0
    %v111 = vsel %vm97, %v52, 0
    %v114 = vsel %vm97, %v53, 0
    %v117 = vsel %vm97, %v54, 0
    %119 = vmatprep.subr.mxu0 0.0
    %120 = vmatpush1.msra.mxu0 %v47
    %121 = vmatprep.subr.mxu0 0.0
    %122 = vmatpush1.msra.mxu0 0.0
    %123 = vmatprep.subr.mxu0 0.0
    %124 = vmatpush1.msra.mxu0 0.0
    %125 = vmatprep.subr.mxu0 0.0
    %126 = vmatpush1.msra.mxu0 0.0
    %127 = vmatprep.subr.mxu0 0.0
    %128 = vmatpush1.msra.mxu0 0.0
    %129 = vmatprep.subr.mxu0 0.0
    %130 = vmatpush1.msra.mxu0 0.0
    %131 = vmatprep.subr.mxu0 0.0
    %132 = vmatpush1.msra.mxu0 0.0
    %133 = vmatprep.subr.mxu0 0.0
    %134 = vmatpush1.msra.mxu0 0.0
    %135 = vmatprep.subr.mxu0 0.0
    %136 = vmatpush1.msra.mxu0 0.0
    %137 = vmatprep.subr.mxu0 0.0
    %138 = vmatpush1.msra.mxu0 0.0
    %139 = vmatprep.subr.mxu0 0.0
    %140 = vmatpush1.msra.mxu0 0.0
    %141 = vmatprep.subr.mxu0 0.0
    %142 = vmatpush1.msra.mxu0 0.0
    %143 = vmatprep.subr.mxu0 0.0
    %144 = vmatpush1.msra.mxu0 0.0
    %145 = vmatprep.subr.mxu0 0.0
    %146 = vmatpush1.msra.mxu0 0.0
    %147 = vmatprep.subr.mxu0 0.0
    %148 = vmatpush1.msra.mxu0 0.0
    %149 = vmatprep.subr.mxu0 0.0
    %150 = vmatpush1.msra.mxu0 0.0
    %151 = vmatprep.subr.mxu0 0.0
    %152 = vmatpush1.msra.mxu0 0.0
    %153 = vmatprep.subr.mxu0 0.0
    %154 = vmatpush1.msra.mxu0 0.0
    %155 = vmatprep.subr.mxu0 0.0
    %156 = vmatpush1.msra.mxu0 0.0
    %157 = vmatprep.subr.mxu0 0.0
    %158 = vmatpush1.msra.mxu0 0.0
    %159 = vmatprep.subr.mxu0 0.0
    %160 = vmatpush1.msra.mxu0 0.0
    %161 = vmatprep.subr.mxu0 0.0
    %162 = vmatpush1.msra.mxu0 0.0
    %163 = vmatprep.subr.mxu0 0.0
    %164 = vmatpush1.msra.mxu0 0.0
    %165 = vmatprep.subr.mxu0 0.0
    %166 = vmatpush1.msra.mxu0 0.0
    %167 = vmatprep.subr.mxu0 0.0
    %168 = vmatpush1.msra.mxu0 0.0
    %169 = vmatprep.subr.mxu0 0.0
    %170 = vmatpush1.msra.mxu0 0.0
    %171 = vmatprep.subr.mxu0 0.0
    %172 = vmatpush1.msra.mxu0 0.0
    %173 = vmatprep.subr.mxu0 0.0
    %174 = vmatpush1.msra.mxu0 0.0
    %175 = vmatprep.subr.mxu0 0.0
    %176 = vmatpush1.msra.mxu0 0.0
    %177 = vmatprep.subr.mxu0 0.0
    %178 = vmatpush1.msra.mxu0 0.0
    %179 = vmatprep.subr.mxu0 0.0
    %180 = vmatpush1.msra.mxu0 0.0
    %181 = vmatprep.subr.mxu0 0.0
    %182 = vmatpush1.msra.mxu0 0.0
    %183 = vmatprep.mubr.f32.mxu0 0.0
    %184 = vmatmul.mubr.f32.gmra.mrb[0].mxu0 %v99
    %v185 = vpop.f32.mrb[0].mxu0
    %v186 = vadd.f32 %v65, %v185
    %v187 = vpop.f32.mrb[0].mxu0
    %188 = vmatprep.mubr.f32.mxu0 0.0
    %189 = vmatmul.mubr.f32.gmra.mrb[0].mxu0 %v102
    %v190 = vpop.f32.mrb[0].mxu0
    %v191 = vadd.f32 %v70, %v190
    %v192 = vpop.f32.mrb[0].mxu0
    %193 = vmatprep.mubr.f32.mxu0 0.0
    %194 = vmatmul.mubr.f32.gmra.mrb[0].mxu0 %v105
    %v195 = vpop.f32.mrb[0].mxu0
    %v196 = vadd.f32 %v75, %v195
    %v197 = vpop.f32.mrb[0].mxu0
    %198 = vmatprep.mubr.f32.mxu0 0.0
    %199 = vmatmul.mubr.f32.gmra.mrb[0].mxu0 %v108
    %v200 = vpop.f32.mrb[0].mxu0
    %v201 = vadd.f32 %v80, %v200
    %v202 = vpop.f32.mrb[0].mxu0
    %203 = vmatprep.mubr.f32.mxu0 0.0
    %204 = vmatmul.mubr.f32.gmra.mrb[0].mxu0 %v111
    %v205 = vpop.f32.mrb[0].mxu0
    %v206 = vadd.f32 %v85, %v205
    %v207 = vpop.f32.mrb[0].mxu0
    %208 = vmatprep.mubr.f32.mxu0 0.0
    %209 = vmatmul.mubr.f32.gmra.mrb[0].mxu0 %v114
    %v210 = vpop.f32.mrb[0].mxu0
    %v211 = vadd.f32 %v90, %v210
    %v212 = vpop.f32.mrb[0].mxu0
    %213 = vmatprep.mubr.f32.mxu0 0.0
    %214 = vmatmul.mubr.f32.gmra.mrb[0].mxu0 %v117
    %v215 = vpop.f32.mrb[0].mxu0
    %v216 = vadd.f32 %v95, %v215
    %v217 = vpop.f32.mrb[0].mxu0
    %218 = vdwg.mxu0
    %v219 = vmax.f32 %v186, 0.0
    %v220 = vmax.f32 %v191, 0.0
    %v221 = vmax.f32 %v196, 0.0
    %v222 = vmax.f32 %v201, 0.0
    %v223 = vmax.f32 %v206, 0.0
    %v224 = vmax.f32 %v211, 0.0
    %v225 = vmax.f32 %v216, 0.0
    %v226 = vld [vmem:[%s3] sm:$0xff]
    %v227 = vld [vmem:[%s3 + $0x8] sm:$0xff]
    %v228 = vld [vmem:[%s3 + $0x10] sm:$0xff]
    %v229 = vld [vmem:[%s3 + $0x18] sm:$0xff]
    %v230 = vld [vmem:[%s3 + $0x20] sm:$0xff]
    %v231 = vld [vmem:[%s3 + $0x28] sm:$0xff]
    %v232 = vld [vmem:[%s3 + $0x30] sm:$0xff]
    %v233 = vld [vmem:[%s3 + $0x38] sm:$0xff]
    %v234 = vld [vmem:[%s3 + $0x40] sm:$0x3f]
    %v235 = vld [vmem:[%s4] sm:$0xff]
    %v236 = vld [vmem:[%s4 + $0x8] sm:$0xff]
    %v237 = vld [vmem:[%s4 + $0x10] sm:$0xff]
    %v238 = vld [vmem:[%s4 + $0x18] sm:$0xff]
    %v239 = vld [vmem:[%s4 + $0x20] sm:$0xff]
    %v240 = vld [vmem:[%s4 + $0x28] sm:$0xff]
    %v241 = vld [vmem:[%s4 + $0x30] sm:$0xff]
    %v242 = vld [vmem:[%s4 + $0x38] sm:$0xff]
    %v243 = vld [vmem:[%s4 + $0x40] sm:$0x3f]
    %245 = vset.pattern.permute.xlu0 0
    %246 = vperm.xlu0 %245, %v235
    %v247 = vpop.permute.xlu0 %246
    %250 = vset.pattern.permute.xlu0 0
    %251 = vperm.xlu0 %250, %v236
    %v252 = vpop.permute.xlu0 %251
    %255 = vset.pattern.permute.xlu0 0
    %256 = vperm.xlu0 %255, %v237
    %v257 = vpop.permute.xlu0 %256
    %260 = vset.pattern.permute.xlu0 0
    %261 = vperm.xlu0 %260, %v238
    %v262 = vpop.permute.xlu0 %261
    %265 = vset.pattern.permute.xlu0 0
    %266 = vperm.xlu0 %265, %v239
    %v267 = vpop.permute.xlu0 %266
    %270 = vset.pattern.permute.xlu0 0
    %271 = vperm.xlu0 %270, %v240
    %v272 = vpop.permute.xlu0 %271
    %275 = vset.pattern.permute.xlu0 0
    %276 = vperm.xlu0 %275, %v241
    %v277 = vpop.permute.xlu0 %276
    %280 = vset.pattern.permute.xlu0 0
    %281 = vperm.xlu0 %280, %v242
    %v282 = vpop.permute.xlu0 %281
    %285 = vset.pattern.permute.xlu0 0
    %286 = vperm.xlu0 %285, %v243
    %v287 = vpop.permute.xlu0 %286
    %vm289 = vcmask 408576
    %v291 = vsel %vm289, %v226, 0
    %v294 = vsel %vm289, %v227, 0
    %v297 = vsel %vm289, %v228, 0
    %v300 = vsel %vm289, %v229, 0
    %v303 = vsel %vm289, %v230, 0
    %v306 = vsel %vm289, %v231, 0
    %v309 = vsel %vm289, %v232, 0
    %v312 = vsel %vm289, %v233, 0
    %v315 = vsel %vm289, %v234, 0
    %vm317 = vcmask 1041408
    %v319 = vsel %vm317, %v225, 0
    %321 = vmatprep.subr.mxu0 0.0
    %322 = vmatpush1.msra.mxu0 %v219
    %323 = vmatprep.subr.mxu0 0.0
    %324 = vmatpush1.msra.mxu0 %v220
    %325 = vmatprep.subr.mxu0 0.0
    %326 = vmatpush1.msra.mxu0 %v221
    %327 = vmatprep.subr.mxu0 0.0
    %328 = vmatpush1.msra.mxu0 %v222
    %329 = vmatprep.subr.mxu0 0.0
    %330 = vmatpush1.msra.mxu0 %v223
    %331 = vmatprep.subr.mxu0 0.0
    %332 = vmatpush1.msra.mxu0 %v224
    %333 = vmatprep.subr.mxu0 0.0
    %334 = vmatpush1.msra.mxu0 %v319
    %335 = vmatprep.subr.mxu0 0.0
    %336 = vmatpush1.msra.mxu0 0.0
    %337 = vmatprep.subr.mxu0 0.0
    %338 = vmatpush1.msra.mxu0 0.0
    %339 = vmatprep.subr.mxu0 0.0
    %340 = vmatpush1.msra.mxu0 0.0
    %341 = vmatprep.subr.mxu0 0.0
    %342 = vmatpush1.msra.mxu0 0.0
    %343 = vmatprep.subr.mxu0 0.0
    %344 = vmatpush1.msra.mxu0 0.0
    %345 = vmatprep.subr.mxu0 0.0
    %346 = vmatpush1.msra.mxu0 0.0
    %347 = vmatprep.subr.mxu0 0.0
    %348 = vmatpush1.msra.mxu0 0.0
    %349 = vmatprep.subr.mxu0 0.0
    %350 = vmatpush1.msra.mxu0 0.0
    %351 = vmatprep.subr.mxu0 0.0
    %352 = vmatpush1.msra.mxu0 0.0
    %353 = vmatprep.subr.mxu0 0.0
    %354 = vmatpush1.msra.mxu0 0.0
    %355 = vmatprep.subr.mxu0 0.0
    %356 = vmatpush1.msra.mxu0 0.0
    %357 = vmatprep.subr.mxu0 0.0
    %358 = vmatpush1.msra.mxu0 0.0
    %359 = vmatprep.subr.mxu0 0.0
    %360 = vmatpush1.msra.mxu0 0.0
    %361 = vmatprep.subr.mxu0 0.0
    %362 = vmatpush1.msra.mxu0 0.0
    %363 = vmatprep.subr.mxu0 0.0
    %364 = vmatpush1.msra.mxu0 0.0
    %365 = vmatprep.subr.mxu0 0.0
    %366 = vmatpush1.msra.mxu0 0.0
    %367 = vmatprep.subr.mxu0 0.0
    %368 = vmatpush1.msra.mxu0 0.0
    %369 = vmatprep.subr.mxu0 0.0
    %370 = vmatpush1.msra.mxu0 0.0
    %371 = vmatprep.subr.mxu0 0.0
    %372 = vmatpush1.msra.mxu0 0.0
    %373 = vmatprep.subr.mxu0 0.0
    %374 = vmatpush1.msra.mxu0 0.0
    %375 = vmatprep.subr.mxu0 0.0
    %376 = vmatpush1.msra.mxu0 0.0
    %377 = vmatprep.subr.mxu0 0.0
    %378 = vmatpush1.msra.mxu0 0.0
    %379 = vmatprep.subr.mxu0 0.0
    %380 = vmatpush1.msra.mxu0 0.0
    %381 = vmatprep.subr.mxu0 0.0
    %382 = vmatpush1.msra.mxu0 0.0
    %383 = vmatprep.subr.mxu0 0.0
    %384 = vmatpush1.msra.mxu0 0.0
    %385 = vmatprep.mubr.f32.mxu0 0.0
    %386 = vmatmul.mubr.f32.gmra.mrb[0].mxu0 %v291
    %v387 = vpop.f32.mrb[0].mxu0
    %v388 = vadd.f32 %v247, %v387
    %v389 = vpop.f32.mrb[0].mxu0
    %390 = vmatprep.mubr.f32.mxu0 0.0
    %391 = vmatmul.mubr.f32.gmra.mrb[0].mxu0 %v294
    %v392 = vpop.f32.mrb[0].mxu0
    %v393 = vadd.f32 %v252, %v392
    %v394 = vpop.f32.mrb[0].mxu0
    %395 = vmatprep.mubr.f32.mxu0 0.0
    %396 = vmatmul.mubr.f32.gmra.mrb[0].mxu0 %v297
    %v397 = vpop.f32.mrb[0].mxu0
    %v398 = vadd.f32 %v257, %v397
    %v399 = vpop.f32.mrb[0].mxu0
    %400 = vmatprep.mubr.f32.mxu0 0.0
    %401 = vmatmul.mubr.f32.gmra.mrb[0].mxu0 %v300
    %v402 = vpop.f32.mrb[0].mxu0
    %v403 = vadd.f32 %v262, %v402
    %v404 = vpop.f32.mrb[0].mxu0
    %405 = vmatprep.mubr.f32.mxu0 0.0
    %406 = vmatmul.mubr.f32.gmra.mrb[0].mxu0 %v303
    %v407 = vpop.f32.mrb[0].mxu0
    %v408 = vadd.f32 %v267, %v407
    %v409 = vpop.f32.mrb[0].mxu0
    %410 = vmatprep.mubr.f32.mxu0 0.0
    %411 = vmatmul.mubr.f32.gmra.mrb[0].mxu0 %v306
    %v412 = vpop.f32.mrb[0].mxu0
    %v413 = vadd.f32 %v272, %v412
    %v414 = vpop.f32.mrb[0].mxu0
    %415 = vmatprep.mubr.f32.mxu0 0.0
    %416 = vmatmul.mubr.f32.gmra.mrb[0].mxu0 %v309
    %v417 = vpop.f32.mrb[0].mxu0
    %v418 = vadd.f32 %v277, %v417
    %v419 = vpop.f32.mrb[0].mxu0
    %420 = vmatprep.mubr.f32.mxu0 0.0
    %421 = vmatmul.mubr.f32.gmra.mrb[0].mxu0 %v312
    %v422 = vpop.f32.mrb[0].mxu0
    %v423 = vadd.f32 %v282, %v422
    %v424 = vpop.f32.mrb[0].mxu0
    %425 = vmatprep.mubr.f32.mxu0 0.0
    %426 = vmatmul.mubr.f32.gmra.mrb[0].mxu0 %v315
    %v427 = vpop.f32.mrb[0].mxu0
    %v428 = vadd.f32 %v287, %v427
    %v429 = vpop.f32.mrb[0].mxu0
    %430 = vdwg.mxu0
    %v431 = vmax.f32 %v388, 0.0
    %v432 = vmax.f32 %v393, 0.0
    %v433 = vmax.f32 %v398, 0.0
    %v434 = vmax.f32 %v403, 0.0
    %v435 = vmax.f32 %v408, 0.0
    %v436 = vmax.f32 %v413, 0.0
    %v437 = vmax.f32 %v418, 0.0
    %v438 = vmax.f32 %v423, 0.0
    %v439 = vmax.f32 %v428, 0.0
    %v440 = vld [vmem:[%s5] sm:$0xff]
    %v441 = vld [vmem:[%s5 + $0x8] sm:$0xff]
    %v442 = vld [vmem:[%s5 + $0x10] sm:$0xff]
    %v443 = vld [vmem:[%s5 + $0x18] sm:$0xff]
    %v444 = vld [vmem:[%s5 + $0x20] sm:$0xff]
    %v445 = vld [vmem:[%s5 + $0x28] sm:$0xff]
    %v446 = vld [vmem:[%s5 + $0x30] sm:$0xff]
    %v447 = vld [vmem:[%s5 + $0x38] sm:$0xff]
    %v448 = vld [vmem:[%s5 + $0x40] sm:$0xff]
    %v449 = vld [vmem:[%s5 + $0x48] sm:$0xff]
    %v450 = vld [vmem:[%s5 + $0x50] sm:$0xff]
    %v451 = vld [vmem:[%s5 + $0x58] sm:$0xff]
    %v452 = vld [vmem:[%s5 + $0x60] sm:$0xff]
    %v453 = vld [vmem:[%s5 + $0x68] sm:$0xff]
    %v454 = vld [vmem:[%s5 + $0x70] sm:$0xff]
    %v455 = vld [vmem:[%s5 + $0x78] sm:$0xff]
    %v456 = vld [vmem:[%s5 + $0x80] sm:$0xff]
    %v457 = vld [vmem:[%s5 + $0x88] sm:$0xff]
    %v458 = vld [vmem:[%s5 + $0x90] sm:$0x3f]
    %v459 = vld [vmem:[%s6] sm:$0xff]
    %v460 = vld [vmem:[%s6 + $0x8] sm:$0xff]
    %v461 = vld [vmem:[%s6 + $0x10] sm:$0xff]
    %v462 = vld [vmem:[%s6 + $0x18] sm:$0xff]
    %v463 = vld [vmem:[%s6 + $0x20] sm:$0xff]
    %v464 = vld [vmem:[%s6 + $0x28] sm:$0xff]
    %v465 = vld [vmem:[%s6 + $0x30] sm:$0xff]
    %v466 = vld [vmem:[%s6 + $0x38] sm:$0xff]
    %v467 = vld [vmem:[%s6 + $0x40] sm:$0xff]
    %v468 = vld [vmem:[%s6 + $0x48] sm:$0xff]
    %v469 = vld [vmem:[%s6 + $0x50] sm:$0xff]
    %v470 = vld [vmem:[%s6 + $0x58] sm:$0xff]
    %v471 = vld [vmem:[%s6 + $0x60] sm:$0xff]
    %v472 = vld [vmem:[%s6 + $0x68] sm:$0xff]
    %v473 = vld [vmem:[%s6 + $0x70] sm:$0xff]
    %v474 = vld [vmem:[%s6 + $0x78] sm:$0xff]
    %v475 = vld [vmem:[%s6 + $0x80] sm:$0xff]
    %v476 = vld [vmem:[%s6 + $0x88] sm:$0xff]
    %v477 = vld [vmem:[%s6 + $0x90] sm:$0x3f]
    %479 = vset.pattern.permute.xlu0 0
    %480 = vperm.xlu0 %479, %v459
    %v481 = vpop.permute.xlu0 %480
    %484 = vset.pattern.permute.xlu0 0
    %485 = vperm.xlu0 %484, %v460
    %v486 = vpop.permute.xlu0 %485
    %489 = vset.pattern.permute.xlu0 0
    %490 = vperm.xlu0 %489, %v461
    %v491 = vpop.permute.xlu0 %490
    %494 = vset.pattern.permute.xlu0 0
    %495 = vperm.xlu0 %494, %v462
    %v496 = vpop.permute.xlu0 %495
    %499 = vset.pattern.permute.xlu0 0
    %500 = vperm.xlu0 %499, %v463
    %v501 = vpop.permute.xlu0 %500
    %504 = vset.pattern.permute.xlu0 0
    %505 = vperm.xlu0 %504, %v464
    %v506 = vpop.permute.xlu0 %505
    %509 = vset.pattern.permute.xlu0 0
    %510 = vperm.xlu0 %509, %v465
    %v511 = vpop.permute.xlu0 %510
    %514 = vset.pattern.permute.xlu0 0
    %515 = vperm.xlu0 %514, %v466
    %v516 = vpop.permute.xlu0 %515
    %519 = vset.pattern.permute.xlu0 0
    %520 = vperm.xlu0 %519, %v467
    %v521 = vpop.permute.xlu0 %520
    %524 = vset.pattern.permute.xlu0 0
    %525 = vperm.xlu0 %524, %v468
    %v526 = vpop.permute.xlu0 %525
    %529 = vset.pattern.permute.xlu0 0
    %530 = vperm.xlu0 %529, %v469
    %v531 = vpop.permute.xlu0 %530
    %534 = vset.pattern.permute.xlu0 0
    %535 = vperm.xlu0 %534, %v470
    %v536 = vpop.permute.xlu0 %535
    %539 = vset.pattern.permute.xlu0 0
    %540 = vperm.xlu0 %539, %v471
    %v541 = vpop.permute.xlu0 %540
    %544 = vset.pattern.permute.xlu0 0
    %545 = vperm.xlu0 %544, %v472
    %v546 = vpop.permute.xlu0 %545
    %549 = vset.pattern.permute.xlu0 0
    %550 = vperm.xlu0 %549, %v473
    %v551 = vpop.permute.xlu0 %550
    %554 = vset.pattern.permute.xlu0 0
    %555 = vperm.xlu0 %554, %v474
    %v556 = vpop.permute.xlu0 %555
    %559 = vset.pattern.permute.xlu0 0
    %560 = vperm.xlu0 %559, %v475
    %v561 = vpop.permute.xlu0 %560
    %564 = vset.pattern.permute.xlu0 0
    %565 = vperm.xlu0 %564, %v476
    %v566 = vpop.permute.xlu0 %565
    %569 = vset.pattern.permute.xlu0 0
    %570 = vperm.xlu0 %569, %v477
    %v571 = vpop.permute.xlu0 %570
    %vm573 = vcmask 572416
    %v575 = vsel %vm573, %v440, 0
    %v578 = vsel %vm573, %v441, 0
    %v581 = vsel %vm573, %v442, 0
    %v584 = vsel %vm573, %v443, 0
    %v587 = vsel %vm573, %v444, 0
    %v590 = vsel %vm573, %v445, 0
    %v593 = vsel %vm573, %v446, 0
    %v596 = vsel %vm573, %v447, 0
    %v599 = vsel %vm573, %v448, 0
    %v602 = vsel %vm573, %v449, 0
    %v605 = vsel %vm573, %v450, 0
    %v608 = vsel %vm573, %v451, 0
    %v611 = vsel %vm573, %v452, 0
    %v614 = vsel %vm573, %v453, 0
    %v617 = vsel %vm573, %v454, 0
    %v620 = vsel %vm573, %v455, 0
    %v623 = vsel %vm573, %v456, 0
    %v626 = vsel %vm573, %v457, 0
    %v629 = vsel %vm573, %v458, 0
    %vm631 = vcmask 1045504
    %v633 = vsel %vm631, %v439, 0
    %635 = vmatprep.subr.mxu0 0.0
    %636 = vmatpush1.msra.mxu0 %v431
    %637 = vmatprep.subr.mxu0 0.0
    %638 = vmatpush1.msra.mxu0 %v432
    %639 = vmatprep.subr.mxu0 0.0
    %640 = vmatpush1.msra.mxu0 %v433
    %641 = vmatprep.subr.mxu0 0.0
    %642 = vmatpush1.msra.mxu0 %v434
    %643 = vmatprep.subr.mxu0 0.0
    %644 = vmatpush1.msra.mxu0 %v435
    %645 = vmatprep.subr.mxu0 0.0
    %646 = vmatpush1.msra.mxu0 %v436
    %647 = vmatprep.subr.mxu0 0.0
    %648 = vmatpush1.msra.mxu0 %v437
    %649 = vmatprep.subr.mxu0 0.0
    %650 = vmatpush1.msra.mxu0 %v438
    %651 = vmatprep.subr.mxu0 0.0
    %652 = vmatpush1.msra.mxu0 %v633
    %653 = vmatprep.subr.mxu0 0.0
    %654 = vmatpush1.msra.mxu0 0.0
    %655 = vmatprep.subr.mxu0 0.0
    %656 = vmatpush1.msra.mxu0 0.0
    %657 = vmatprep.subr.mxu0 0.0
    %658 = vmatpush1.msra.mxu0 0.0
    %659 = vmatprep.subr.mxu0 0.0
    %660 = vmatpush1.msra.mxu0 0.0
    %661 = vmatprep.subr.mxu0 0.0
    %662 = vmatpush1.msra.mxu0 0.0
    %663 = vmatprep.subr.mxu0 0.0
    %664 = vmatpush1.msra.mxu0 0.0
    %665 = vmatprep.subr.mxu0 0.0
    %666 = vmatpush1.msra.mxu0 0.0
    %667 = vmatprep.subr.mxu0 0.0
    %668 = vmatpush1.msra.mxu0 0.0
    %669 = vmatprep.subr.mxu0 0.0
    %670 = vmatpush1.msra.mxu0 0.0
    %671 = vmatprep.subr.mxu0 0.0
    %672 = vmatpush1.msra.mxu0 0.0
    %673 = vmatprep.subr.mxu0 0.0
    %674 = vmatpush1.msra.mxu0 0.0
    %675 = vmatprep.subr.mxu0 0.0
    %676 = vmatpush1.msra.mxu0 0.0
    %677 = vmatprep.subr.mxu0 0.0
    %678 = vmatpush1.msra.mxu0 0.0
    %679 = vmatprep.subr.mxu0 0.0
    %680 = vmatpush1.msra.mxu0 0.0
    %681 = vmatprep.subr.mxu0 0.0
    %682 = vmatpush1.msra.mxu0 0.0
    %683 = vmatprep.subr.mxu0 0.0
    %684 = vmatpush1.msra.mxu0 0.0
    %685 = vmatprep.subr.mxu0 0.0
    %686 = vmatpush1.msra.mxu0 0.0
    %687 = vmatprep.subr.mxu0 0.0
    %688 = vmatpush1.msra.mxu0 0.0
    %689 = vmatprep.subr.mxu0 0.0
    %690 = vmatpush1.msra.mxu0 0.0
    %691 = vmatprep.subr.mxu0 0.0
    %692 = vmatpush1.msra.mxu0 0.0
    %693 = vmatprep.subr.mxu0 0.0
    %694 = vmatpush1.msra.mxu0 0.0
    %695 = vmatprep.subr.mxu0 0.0
    %696 = vmatpush1.msra.mxu0 0.0
    %697 = vmatprep.subr.mxu0 0.0
    %698 = vmatpush1.msra.mxu0 0.0
    %699 = vmatprep.mubr.f32.mxu0 0.0
    %700 = vmatmul.mubr.f32.gmra.mrb[0].mxu0 %v575
    %v701 = vpop.f32.mrb[0].mxu0
    %v702 = vadd.f32 %v481, %v701
    %v703 = vpop.f32.mrb[0].mxu0
    %704 = vmatprep.mubr.f32.mxu0 0.0
    %705 = vmatmul.mubr.f32.gmra.mrb[0].mxu0 %v578
    %v706 = vpop.f32.mrb[0].mxu0
    %v707 = vadd.f32 %v486, %v706
    %v708 = vpop.f32.mrb[0].mxu0
    %709 = vmatprep.mubr.f32.mxu0 0.0
    %710 = vmatmul.mubr.f32.gmra.mrb[0].mxu0 %v581
    %v711 = vpop.f32.mrb[0].mxu0
    %v712 = vadd.f32 %v491, %v711
    %v713 = vpop.f32.mrb[0].mxu0
    %714 = vmatprep.mubr.f32.mxu0 0.0
    %715 = vmatmul.mubr.f32.gmra.mrb[0].mxu0 %v584
    %v716 = vpop.f32.mrb[0].mxu0
    %v717 = vadd.f32 %v496, %v716
    %v718 = vpop.f32.mrb[0].mxu0
    %719 = vmatprep.mubr.f32.mxu0 0.0
    %720 = vmatmul.mubr.f32.gmra.mrb[0].mxu0 %v587
    %v721 = vpop.f32.mrb[0].mxu0
    %v722 = vadd.f32 %v501, %v721
    %v723 = vpop.f32.mrb[0].mxu0
    %724 = vmatprep.mubr.f32.mxu0 0.0
    %725 = vmatmul.mubr.f32.gmra.mrb[0].mxu0 %v590
    %v726 = vpop.f32.mrb[0].mxu0
    %v727 = vadd.f32 %v506, %v726
    %v728 = vpop.f32.mrb[0].mxu0
    %729 = vmatprep.mubr.f32.mxu0 0.0
    %730 = vmatmul.mubr.f32.gmra.mrb[0].mxu0 %v593
    %v731 = vpop.f32.mrb[0].mxu0
    %v732 = vadd.f32 %v511, %v731
    %v733 = vpop.f32.mrb[0].mxu0
    %734 = vmatprep.mubr.f32.mxu0 0.0
    %735 = vmatmul.mubr.f32.gmra.mrb[0].mxu0 %v596
    %v736 = vpop.f32.mrb[0].mxu0
    %v737 = vadd.f32 %v516, %v736
    %v738 = vpop.f32.mrb[0].mxu0
    %739 = vmatprep.mubr.f32.mxu0 0.0
    %740 = vmatmul.mubr.f32.gmra.mrb[0].mxu0 %v599
    %v741 = vpop.f32.mrb[0].mxu0
    %v742 = vadd.f32 %v521, %v741
    %v743 = vpop.f32.mrb[0].mxu0
    %744 = vmatprep.mubr.f32.mxu0 0.0
    %745 = vmatmul.mubr.f32.gmra.mrb[0].mxu0 %v602
    %v746 = vpop.f32.mrb[0].mxu0
    %v747 = vadd.f32 %v526, %v746
    %v748 = vpop.f32.mrb[0].mxu0
    %749 = vmatprep.mubr.f32.mxu0 0.0
    %750 = vmatmul.mubr.f32.gmra.mrb[0].mxu0 %v605
    %v751 = vpop.f32.mrb[0].mxu0
    %v752 = vadd.f32 %v531, %v751
    %v753 = vpop.f32.mrb[0].mxu0
    %754 = vmatprep.mubr.f32.mxu0 0.0
    %755 = vmatmul.mubr.f32.gmra.mrb[0].mxu0 %v608
    %v756 = vpop.f32.mrb[0].mxu0
    %v757 = vadd.f32 %v536, %v756
    %v758 = vpop.f32.mrb[0].mxu0
    %759 = vmatprep.mubr.f32.mxu0 0.0
    %760 = vmatmul.mubr.f32.gmra.mrb[0].mxu0 %v611
    %v761 = vpop.f32.mrb[0].mxu0
    %v762 = vadd.f32 %v541, %v761
    %v763 = vpop.f32.mrb[0].mxu0
    %764 = vmatprep.mubr.f32.mxu0 0.0
    %765 = vmatmul.mubr.f32.gmra.mrb[0].mxu0 %v614
    %v766 = vpop.f32.mrb[0].mxu0
    %v767 = vadd.f32 %v546, %v766
    %v768 = vpop.f32.mrb[0].mxu0
    %769 = vmatprep.mubr.f32.mxu0 0.0
    %770 = vmatmul.mubr.f32.gmra.mrb[0].mxu0 %v617
    %v771 = vpop.f32.mrb[0].mxu0
    %v772 = vadd.f32 %v551, %v771
    %v773 = vpop.f32.mrb[0].mxu0
    %774 = vmatprep.mubr.f32.mxu0 0.0
    %775 = vmatmul.mubr.f32.gmra.mrb[0].mxu0 %v620
    %v776 = vpop.f32.mrb[0].mxu0
    %v777 = vadd.f32 %v556, %v776
    %v778 = vpop.f32.mrb[0].mxu0
    %779 = vmatprep.mubr.f32.mxu0 0.0
    %780 = vmatmul.mubr.f32.gmra.mrb[0].mxu0 %v623
    %v781 = vpop.f32.mrb[0].mxu0
    %v782 = vadd.f32 %v561, %v781
    %v783 = vpop.f32.mrb[0].mxu0
    %784 = vmatprep.mubr.f32.mxu0 0.0
    %785 = vmatmul.mubr.f32.gmra.mrb[0].mxu0 %v626
    %v786 = vpop.f32.mrb[0].mxu0
    %v787 = vadd.f32 %v566, %v786
    %v788 = vpop.f32.mrb[0].mxu0
    %789 = vmatprep.mubr.f32.mxu0 0.0
    %790 = vmatmul.mubr.f32.gmra.mrb[0].mxu0 %v629
    %v791 = vpop.f32.mrb[0].mxu0
    %v792 = vadd.f32 %v571, %v791
    %v793 = vpop.f32.mrb[0].mxu0
    %794 = vdwg.mxu0
    %v795 = vmax.f32 %v702, 0.0
    %v796 = vmax.f32 %v707, 0.0
    %v797 = vmax.f32 %v712, 0.0
    %v798 = vmax.f32 %v717, 0.0
    %v799 = vmax.f32 %v722, 0.0
    %v800 = vmax.f32 %v727, 0.0
    %v801 = vmax.f32 %v732, 0.0
    %v802 = vmax.f32 %v737, 0.0
    %v803 = vmax.f32 %v742, 0.0
    %v804 = vmax.f32 %v747, 0.0
    %v805 = vmax.f32 %v752, 0.0
    %v806 = vmax.f32 %v757, 0.0
    %v807 = vmax.f32 %v762, 0.0
    %v808 = vmax.f32 %v767, 0.0
    %v809 = vmax.f32 %v772, 0.0
    %v810 = vmax.f32 %v777, 0.0
    %v811 = vmax.f32 %v782, 0.0
    %v812 = vmax.f32 %v787, 0.0
    %v813 = vmax.f32 %v792, 0.0
    %v814 = vld [vmem:[%s7] sm:$0xff]
    %v815 = vld [vmem:[%s7 + $0x8] sm:$0xff]
    %v816 = vld [vmem:[%s7 + $0x10] sm:$0xff]
    %v817 = vld [vmem:[%s7 + $0x18] sm:$0xff]
    %v818 = vld [vmem:[%s7 + $0x20] sm:$0xff]
    %v819 = vld [vmem:[%s7 + $0x28] sm:$0xff]
    %v820 = vld [vmem:[%s7 + $0x30] sm:$0xff]
    %v821 = vld [vmem:[%s7 + $0x38] sm:$0xff]
    %v822 = vld [vmem:[%s7 + $0x40] sm:$0xff]
    %v823 = vld [vmem:[%s7 + $0x48] sm:$0xff]
    %v824 = vld [vmem:[%s7 + $0x50] sm:$0xff]
    %v825 = vld [vmem:[%s7 + $0x58] sm:$0xff]
    %v826 = vld [vmem:[%s7 + $0x60] sm:$0xff]
    %v827 = vld [vmem:[%s7 + $0x68] sm:$0xff]
    %v828 = vld [vmem:[%s7 + $0x70] sm:$0xff]
    %v829 = vld [vmem:[%s7 + $0x78] sm:$0xff]
    %v830 = vld [vmem:[%s7 + $0x80] sm:$0xff]
    %v831 = vld [vmem:[%s7 + $0x88] sm:$0xff]
    %v832 = vld [vmem:[%s7 + $0x90] sm:$0xff]
    %v833 = vld [vmem:[%s7 + $0x98] sm:$0xff]
    %v834 = vld [vmem:[%s7 + $0xa0] sm:$0xff]
    %v835 = vld [vmem:[%s7 + $0xa8] sm:$0xff]
    %v836 = vld [vmem:[%s7 + $0xb0] sm:$0xff]
    %v837 = vld [vmem:[%s7 + $0xb8] sm:$0xff]
    %v838 = vld [vmem:[%s7 + $0xc0] sm:$0xf]
    %v839 = vld [vmem:[%s7 + $0xc8] sm:$0xf]
    %v840 = vld [vmem:[%s8] sm:$0xff]
    %v841 = vld [vmem:[%s8 + $0x8] sm:$0xff]
    %v842 = vld [vmem:[%s8 + $0x10] sm:$0xff]
    %v843 = vld [vmem:[%s8 + $0x18] sm:$0xff]
    %v844 = vld [vmem:[%s8 + $0x20] sm:$0xff]
    %v845 = vld [vmem:[%s8 + $0x28] sm:$0xff]
    %v846 = vld [vmem:[%s8 + $0x30] sm:$0xff]
    %v847 = vld [vmem:[%s8 + $0x38] sm:$0xff]
    %v848 = vld [vmem:[%s8 + $0x40] sm:$0xff]
    %v849 = vld [vmem:[%s8 + $0x48] sm:$0xff]
    %v850 = vld [vmem:[%s8 + $0x50] sm:$0xff]
    %v851 = vld [vmem:[%s8 + $0x58] sm:$0xff]
    %v852 = vld [vmem:[%s8 + $0x60] sm:$0xf]
    %854 = vset.pattern.permute.xlu0 0
    %855 = vperm.xlu0 %854, %v840
    %v856 = vpop.permute.xlu0 %855
    %859 = vset.pattern.permute.xlu0 0
    %860 = vperm.xlu0 %859, %v841
    %v861 = vpop.permute.xlu0 %860
    %864 = vset.pattern.permute.xlu0 0
    %865 = vperm.xlu0 %864, %v842
    %v866 = vpop.permute.xlu0 %865
    %869 = vset.pattern.permute.xlu0 0
    %870 = vperm.xlu0 %869, %v843
    %v871 = vpop.permute.xlu0 %870
    %874 = vset.pattern.permute.xlu0 0
    %875 = vperm.xlu0 %874, %v844
    %v876 = vpop.permute.xlu0 %875
    %879 = vset.pattern.permute.xlu0 0
    %880 = vperm.xlu0 %879, %v845
    %v881 = vpop.permute.xlu0 %880
    %884 = vset.pattern.permute.xlu0 0
    %885 = vperm.xlu0 %884, %v846
    %v886 = vpop.permute.xlu0 %885
    %889 = vset.pattern.permute.xlu0 0
    %890 = vperm.xlu0 %889, %v847
    %v891 = vpop.permute.xlu0 %890
    %894 = vset.pattern.permute.xlu0 0
    %895 = vperm.xlu0 %894, %v848
    %v896 = vpop.permute.xlu0 %895
    %899 = vset.pattern.permute.xlu0 0
    %900 = vperm.xlu0 %899, %v849
    %v901 = vpop.permute.xlu0 %900
    %904 = vset.pattern.permute.xlu0 0
    %905 = vperm.xlu0 %904, %v850
    %v906 = vpop.permute.xlu0 %905
    %909 = vset.pattern.permute.xlu0 0
    %910 = vperm.xlu0 %909, %v851
    %v911 = vpop.permute.xlu0 %910
    %914 = vset.pattern.permute.xlu0 0
    %915 = vperm.xlu0 %914, %v852
    %v916 = vpop.permute.xlu0 %915
    %vm918 = vcmask 179200
    %v920 = vsel %vm918, %v815, 0
    %v923 = vsel %vm918, %v817, 0
    %v926 = vsel %vm918, %v819, 0
    %v929 = vsel %vm918, %v821, 0
    %v932 = vsel %vm918, %v823, 0
    %v935 = vsel %vm918, %v825, 0
    %v938 = vsel %vm918, %v827, 0
    %v941 = vsel %vm918, %v829, 0
    %v944 = vsel %vm918, %v831, 0
    %v947 = vsel %vm918, %v833, 0
    %v950 = vsel %vm918, %v835, 0
    %v953 = vsel %vm918, %v837, 0
    %v956 = vsel %vm918, %v839, 0
    %v959 = vsel %vm631, %v813, 0
    %961 = vmatprep.subr.mxu0 0.0
    %962 = vmatpush1.msra.mxu0 %v795
    %963 = vmatprep.subr.mxu0 0.0
    %964 = vmatpush1.msra.mxu0 %v796
    %965 = vmatprep.subr.mxu0 0.0
    %966 = vmatpush1.msra.mxu0 %v797
    %967 = vmatprep.subr.mxu0 0.0
    %968 = vmatpush1.msra.mxu0 %v798
    %969 = vmatprep.subr.mxu0 0.0
    %970 = vmatpush1.msra.mxu0 %v799
    %971 = vmatprep.subr.mxu0 0.0
    %972 = vmatpush1.msra.mxu0 %v800
    %973 = vmatprep.subr.mxu0 0.0
    %974 = vmatpush1.msra.mxu0 %v801
    %975 = vmatprep.subr.mxu0 0.0
    %976 = vmatpush1.msra.mxu0 %v802
    %977 = vmatprep.subr.mxu0 0.0
    %978 = vmatpush1.msra.mxu0 %v803
    %979 = vmatprep.subr.mxu0 0.0
    %980 = vmatpush1.msra.mxu0 %v804
    %981 = vmatprep.subr.mxu0 0.0
    %982 = vmatpush1.msra.mxu0 %v805
    %983 = vmatprep.subr.mxu0 0.0
    %984 = vmatpush1.msra.mxu0 %v806
    %985 = vmatprep.subr.mxu0 0.0
    %986 = vmatpush1.msra.mxu0 %v807
    %987 = vmatprep.subr.mxu0 0.0
    %988 = vmatpush1.msra.mxu0 %v808
    %989 = vmatprep.subr.mxu0 0.0
    %990 = vmatpush1.msra.mxu0 %v809
    %991 = vmatprep.subr.mxu0 0.0
    %992 = vmatpush1.msra.mxu0 %v810
    %993 = vmatprep.subr.mxu0 0.0
    %994 = vmatpush1.msra.mxu0 %v811
    %995 = vmatprep.subr.mxu0 0.0
    %996 = vmatpush1.msra.mxu0 %v812
    %997 = vmatprep.subr.mxu0 0.0
    %998 = vmatpush1.msra.mxu0 %v959
    %999 = vmatprep.subr.mxu0 0.0
    %1000 = vmatpush1.msra.mxu0 0.0
    %1001 = vmatprep.subr.mxu0 0.0
    %1002 = vmatpush1.msra.mxu0 0.0
    %1003 = vmatprep.subr.mxu0 0.0
    %1004 = vmatpush1.msra.mxu0 0.0
    %1005 = vmatprep.subr.mxu0 0.0
    %1006 = vmatpush1.msra.mxu0 0.0
    %1007 = vmatprep.subr.mxu0 0.0
    %1008 = vmatpush1.msra.mxu0 0.0
    %1009 = vmatprep.subr.mxu0 0.0
    %1010 = vmatpush1.msra.mxu0 0.0
    %1011 = vmatprep.subr.mxu0 0.0
    %1012 = vmatpush1.msra.mxu0 0.0
    %1013 = vmatprep.subr.mxu0 0.0
    %1014 = vmatpush1.msra.mxu0 0.0
    %1015 = vmatprep.subr.mxu0 0.0
    %1016 = vmatpush1.msra.mxu0 0.0
    %1017 = vmatprep.subr.mxu0 0.0
    %1018 = vmatpush1.msra.mxu0 0.0
    %1019 = vmatprep.subr.mxu0 0.0
    %1020 = vmatpush1.msra.mxu0 0.0
    %1021 = vmatprep.subr.mxu0 0.0
    %1022 = vmatpush1.msra.mxu0 0.0
    %1023 = vmatprep.subr.mxu0 0.0
    %1024 = vmatpush1.msra.mxu0 0.0
    %1025 = vmatprep.mubr.f32.mxu0 %v920
    %1026 = vmatmul.mubr.f32.gmra.mrb[0].mxu0 %v814
    %v1027 = vpop.f32.mrb[0].mxu0
    %v1028 = vadd.f32 %v856, %v1027
    %v1029 = vpop.f32.mrb[0].mxu0
    %1030 = vmatprep.mubr.f32.mxu0 %v923
    %1031 = vmatmul.mubr.f32.gmra.mrb[0].mxu0 %v816
    %v1032 = vpop.f32.mrb[0].mxu0
    %v1033 = vadd.f32 %v861, %v1032
    %v1034 = vpop.f32.mrb[0].mxu0
    %1035 = vmatprep.mubr.f32.mxu0 %v926
    %1036 = vmatmul.mubr.f32.gmra.mrb[0].mxu0 %v818
    %v1037 = vpop.f32.mrb[0].mxu0
    %v1038 = vadd.f32 %v866, %v1037
    %v1039 = vpop.f32.mrb[0].mxu0
    %1040 = vmatprep.mubr.f32.mxu0 %v929
    %1041 = vmatmul.mubr.f32.gmra.mrb[0].mxu0 %v820
    %v1042 = vpop.f32.mrb[0].mxu0
    %v1043 = vadd.f32 %v871, %v1042
    %v1044 = vpop.f32.mrb[0].mxu0
    %1045 = vmatprep.mubr.f32.mxu0 %v932
    %1046 = vmatmul.mubr.f32.gmra.mrb[0].mxu0 %v822
    %v1047 = vpop.f32.mrb[0].mxu0
    %v1048 = vadd.f32 %v876, %v1047
    %v1049 = vpop.f32.mrb[0].mxu0
    %1050 = vmatprep.mubr.f32.mxu0 %v935
    %1051 = vmatmul.mubr.f32.gmra.mrb[0].mxu0 %v824
    %v1052 = vpop.f32.mrb[0].mxu0
    %v1053 = vadd.f32 %v881, %v1052
    %v1054 = vpop.f32.mrb[0].mxu0
    %1055 = vmatprep.mubr.f32.mxu0 %v938
    %1056 = vmatmul.mubr.f32.gmra.mrb[0].mxu0 %v826
    %v1057 = vpop.f32.mrb[0].mxu0
    %v1058 = vadd.f32 %v886, %v1057
    %v1059 = vpop.f32.mrb[0].mxu0
    %1060 = vmatprep.mubr.f32.mxu0 %v941
    %1061 = vmatmul.mubr.f32.gmra.mrb[0].mxu0 %v828
    %v1062 = vpop.f32.mrb[0].mxu0
    %v1063 = vadd.f32 %v891, %v1062
    %v1064 = vpop.f32.mrb[0].mxu0
    %1065 = vmatprep.mubr.f32.mxu0 %v944
    %1066 = vmatmul.mubr.f32.gmra.mrb[0].mxu0 %v830
    %v1067 = vpop.f32.mrb[0].mxu0
    %v1068 = vadd.f32 %v896, %v1067
    %v1069 = vpop.f32.mrb[0].mxu0
    %1070 = vmatprep.mubr.f32.mxu0 %v947
    %1071 = vmatmul.mubr.f32.gmra.mrb[0].mxu0 %v832
    %v1072 = vpop.f32.mrb[0].mxu0
    %v1073 = vadd.f32 %v901, %v1072
    %v1074 = vpop.f32.mrb[0].mxu0
    %1075 = vmatprep.mubr.f32.mxu0 %v950
    %1076 = vmatmul.mubr.f32.gmra.mrb[0].mxu0 %v834
    %v1077 = vpop.f32.mrb[0].mxu0
    %v1078 = vadd.f32 %v906, %v1077
    %v1079 = vpop.f32.mrb[0].mxu0
    %1080 = vmatprep.mubr.f32.mxu0 %v953
    %1081 = vmatmul.mubr.f32.gmra.mrb[0].mxu0 %v836
    %v1082 = vpop.f32.mrb[0].mxu0
    %v1083 = vadd.f32 %v911, %v1082
    %v1084 = vpop.f32.mrb[0].mxu0
    %1085 = vmatprep.mubr.f32.mxu0 %v956
    %1086 = vmatmul.mubr.f32.gmra.mrb[0].mxu0 %v838
    %v1087 = vpop.f32.mrb[0].mxu0
    %v1088 = vadd.f32 %v916, %v1087
    %v1089 = vpop.f32.mrb[0].mxu0
    %1090 = vdwg.mxu0
    %v1091 = vmax.f32 %v1028, 0.0
    %v1092 = vmax.f32 %v1033, 0.0
    %v1093 = vmax.f32 %v1038, 0.0
    %v1094 = vmax.f32 %v1043, 0.0
    %v1095 = vmax.f32 %v1048, 0.0
    %v1096 = vmax.f32 %v1053, 0.0
    %v1097 = vmax.f32 %v1058, 0.0
    %v1098 = vmax.f32 %v1063, 0.0
    %v1099 = vmax.f32 %v1068, 0.0
    %v1100 = vmax.f32 %v1073, 0.0
    %v1101 = vmax.f32 %v1078, 0.0
    %v1102 = vmax.f32 %v1083, 0.0
    %v1103 = vmax.f32 %v1088, 0.0
    %v1104 = vld [vmem:[%s9] sm:$0xff]
    %v1105 = vld [vmem:[%s9 + $0x8] sm:$0xff]
    %v1106 = vld [vmem:[%s9 + $0x10] sm:$0xff]
    %v1107 = vld [vmem:[%s9 + $0x18] sm:$0xff]
    %v1108 = vld [vmem:[%s9 + $0x20] sm:$0xff]
    %v1109 = vld [vmem:[%s9 + $0x28] sm:$0xff]
    %v1110 = vld [vmem:[%s9 + $0x30] sm:$0x3]
    %v1111 = vld [vmem:[%s10] sm:$0xff]
    %v1112 = vld [vmem:[%s10 + $0x8] sm:$0xff]
    %v1113 = vld [vmem:[%s10 + $0x10] sm:$0xff]
    %v1114 = vld [vmem:[%s10 + $0x18] sm:$0xff]
    %v1115 = vld [vmem:[%s10 + $0x20] sm:$0xff]
    %v1116 = vld [vmem:[%s10 + $0x28] sm:$0xff]
    %v1117 = vld [vmem:[%s10 + $0x30] sm:$0x3]
    %1119 = vset.pattern.permute.xlu0 0
    %1120 = vperm.xlu0 %1119, %v1111
    %v1121 = vpop.permute.xlu0 %1120
    %1124 = vset.pattern.permute.xlu0 0
    %1125 = vperm.xlu0 %1124, %v1112
    %v1126 = vpop.permute.xlu0 %1125
    %1129 = vset.pattern.permute.xlu0 0
    %1130 = vperm.xlu0 %1129, %v1113
    %v1131 = vpop.permute.xlu0 %1130
    %1134 = vset.pattern.permute.xlu0 0
    %1135 = vperm.xlu0 %1134, %v1114
    %v1136 = vpop.permute.xlu0 %1135
    %1139 = vset.pattern.permute.xlu0 0
    %1140 = vperm.xlu0 %1139, %v1115
    %v1141 = vpop.permute.xlu0 %1140
    %1144 = vset.pattern.permute.xlu0 0
    %1145 = vperm.xlu0 %1144, %v1116
    %v1146 = vpop.permute.xlu0 %1145
    %1149 = vset.pattern.permute.xlu0 0
    %1150 = vperm.xlu0 %1149, %v1117
    %v1151 = vpop.permute.xlu0 %1150
    %vm1153 = vcmask 818176
    %v1155 = vsel %vm1153, %v1104, 0
    %v1158 = vsel %vm1153, %v1105, 0
    %v1161 = vsel %vm1153, %v1106, 0
    %v1164 = vsel %vm1153, %v1107, 0
    %v1167 = vsel %vm1153, %v1108, 0
    %v1170 = vsel %vm1153, %v1109, 0
    %v1173 = vsel %vm1153, %v1110, 0
    %vm1175 = vcmask 1043456
    %v1177 = vsel %vm1175, %v1103, 0
    %1179 = vmatprep.subr.mxu0 0.0
    %1180 = vmatpush1.msra.mxu0 %v1091
    %1181 = vmatprep.subr.mxu0 0.0
    %1182 = vmatpush1.msra.mxu0 %v1092
    %1183 = vmatprep.subr.mxu0 0.0
    %1184 = vmatpush1.msra.mxu0 %v1093
    %1185 = vmatprep.subr.mxu0 0.0
    %1186 = vmatpush1.msra.mxu0 %v1094
    %1187 = vmatprep.subr.mxu0 0.0
    %1188 = vmatpush1.msra.mxu0 %v1095
    %1189 = vmatprep.subr.mxu0 0.0
    %1190 = vmatpush1.msra.mxu0 %v1096
    %1191 = vmatprep.subr.mxu0 0.0
    %1192 = vmatpush1.msra.mxu0 %v1097
    %1193 = vmatprep.subr.mxu0 0.0
    %1194 = vmatpush1.msra.mxu0 %v1098
    %1195 = vmatprep.subr.mxu0 0.0
    %1196 = vmatpush1.msra.mxu0 %v1099
    %1197 = vmatprep.subr.mxu0 0.0
    %1198 = vmatpush1.msra.mxu0 %v1100
    %1199 = vmatprep.subr.mxu0 0.0
    %1200 = vmatpush1.msra.mxu0 %v1101
    %1201 = vmatprep.subr.mxu0 0.0
    %1202 = vmatpush1.msra.mxu0 %v1102
    %1203 = vmatprep.subr.mxu0 0.0
    %1204 = vmatpush1.msra.mxu0 %v1177
    %1205 = vmatprep.subr.mxu0 0.0
    %1206 = vmatpush1.msra.mxu0 0.0
    %1207 = vmatprep.subr.mxu0 0.0
    %1208 = vmatpush1.msra.mxu0 0.0
    %1209 = vmatprep.subr.mxu0 0.0
    %1210 = vmatpush1.msra.mxu0 0.0
    %1211 = vmatprep.subr.mxu0 0.0
    %1212 = vmatpush1.msra.mxu0 0.0
    %1213 = vmatprep.subr.mxu0 0.0
    %1214 = vmatpush1.msra.mxu0 0.0
    %1215 = vmatprep.subr.mxu0 0.0
    %1216 = vmatpush1.msra.mxu0 0.0
    %1217 = vmatprep.subr.mxu0 0.0
    %1218 = vmatpush1.msra.mxu0 0.0
    %1219 = vmatprep.subr.mxu0 0.0
    %1220 = vmatpush1.msra.mxu0 0.0
    %1221 = vmatprep.subr.mxu0 0.0
    %1222 = vmatpush1.msra.mxu0 0.0
    %1223 = vmatprep.subr.mxu0 0.0
    %1224 = vmatpush1.msra.mxu0 0.0
    %1225 = vmatprep.subr.mxu0 0.0
    %1226 = vmatpush1.msra.mxu0 0.0
    %1227 = vmatprep.subr.mxu0 0.0
    %1228 = vmatpush1.msra.mxu0 0.0
    %1229 = vmatprep.subr.mxu0 0.0
    %1230 = vmatpush1.msra.mxu0 0.0
    %1231 = vmatprep.subr.mxu0 0.0
    %1232 = vmatpush1.msra.mxu0 0.0
    %1233 = vmatprep.subr.mxu0 0.0
    %1234 = vmatpush1.msra.mxu0 0.0
    %1235 = vmatprep.subr.mxu0 0.0
    %1236 = vmatpush1.msra.mxu0 0.0
    %1237 = vmatprep.subr.mxu0 0.0
    %1238 = vmatpush1.msra.mxu0 0.0
    %1239 = vmatprep.subr.mxu0 0.0
    %1240 = vmatpush1.msra.mxu0 0.0
    %1241 = vmatprep.subr.mxu0 0.0
    %1242 = vmatpush1.msra.mxu0 0.0
    %1243 = vmatprep.mubr.f32.mxu0 0.0
    %1244 = vmatmul.mubr.f32.gmra.mrb[0].mxu0 %v1155
    %v1245 = vpop.f32.mrb[0].mxu0
    %v1246 = vadd.f32 %v1121, %v1245
    %v1247 = vpop.f32.mrb[0].mxu0
    %1248 = vmatprep.mubr.f32.mxu0 0.0
    %1249 = vmatmul.mubr.f32.gmra.mrb[0].mxu0 %v1158
    %v1250 = vpop.f32.mrb[0].mxu0
    %v1251 = vadd.f32 %v1126, %v1250
    %v1252 = vpop.f32.mrb[0].mxu0
    %1253 = vmatprep.mubr.f32.mxu0 0.0
    %1254 = vmatmul.mubr.f32.gmra.mrb[0].mxu0 %v1161
    %v1255 = vpop.f32.mrb[0].mxu0
    %v1256 = vadd.f32 %v1131, %v1255
    %v1257 = vpop.f32.mrb[0].mxu0
    %1258 = vmatprep.mubr.f32.mxu0 0.0
    %1259 = vmatmul.mubr.f32.gmra.mrb[0].mxu0 %v1164
    %v1260 = vpop.f32.mrb[0].mxu0
    %v1261 = vadd.f32 %v1136, %v1260
    %v1262 = vpop.f32.mrb[0].mxu0
    %1263 = vmatprep.mubr.f32.mxu0 0.0
    %1264 = vmatmul.mubr.f32.gmra.mrb[0].mxu0 %v1167
    %v1265 = vpop.f32.mrb[0].mxu0
    %v1266 = vadd.f32 %v1141, %v1265
    %v1267 = vpop.f32.mrb[0].mxu0
    %1268 = vmatprep.mubr.f32.mxu0 0.0
    %1269 = vmatmul.mubr.f32.gmra.mrb[0].mxu0 %v1170
    %v1270 = vpop.f32.mrb[0].mxu0
    %v1271 = vadd.f32 %v1146, %v1270
    %v1272 = vpop.f32.mrb[0].mxu0
    %1273 = vmatprep.mubr.f32.mxu0 0.0
    %1274 = vmatmul.mubr.f32.gmra.mrb[0].mxu0 %v1173
    %v1275 = vpop.f32.mrb[0].mxu0
    %v1276 = vadd.f32 %v1151, %v1275
    %v1277 = vpop.f32.mrb[0].mxu0
    %1278 = vdwg.mxu0
    %v1279 = vmax.f32 %v1246, 0.0
    %v1280 = vmax.f32 %v1251, 0.0
    %v1281 = vmax.f32 %v1256, 0.0
    %v1282 = vmax.f32 %v1261, 0.0
    %v1283 = vmax.f32 %v1266, 0.0
    %v1284 = vmax.f32 %v1271, 0.0
    %v1285 = vmax.f32 %v1276, 0.0
    %v1286 = vld [vmem:[%s11] sm:$0xff]
    %v1288 = vsel %vm289, %v1286, 0
    %v1291 = vsel %vm317, %v1285, 0
    %1293 = vmatprep.subr.mxu0 0.0
    %1294 = vmatpush1.msra.mxu0 %v1279
    %1295 = vmatprep.subr.mxu0 0.0
    %1296 = vmatpush1.msra.mxu0 %v1280
    %1297 = vmatprep.subr.mxu0 0.0
    %1298 = vmatpush1.msra.mxu0 %v1281
    %1299 = vmatprep.subr.mxu0 0.0
    %1300 = vmatpush1.msra.mxu0 %v1282
    %1301 = vmatprep.subr.mxu0 0.0
    %1302 = vmatpush1.msra.mxu0 %v1283
    %1303 = vmatprep.subr.mxu0 0.0
    %1304 = vmatpush1.msra.mxu0 %v1284
    %1305 = vmatprep.subr.mxu0 0.0
    %1306 = vmatpush1.msra.mxu0 %v1291
    %1307 = vmatprep.subr.mxu0 0.0
    %1308 = vmatpush1.msra.mxu0 0.0
    %1309 = vmatprep.subr.mxu0 0.0
    %1310 = vmatpush1.msra.mxu0 0.0
    %1311 = vmatprep.subr.mxu0 0.0
    %1312 = vmatpush1.msra.mxu0 0.0
    %1313 = vmatprep.subr.mxu0 0.0
    %1314 = vmatpush1.msra.mxu0 0.0
    %1315 = vmatprep.subr.mxu0 0.0
    %1316 = vmatpush1.msra.mxu0 0.0
    %1317 = vmatprep.subr.mxu0 0.0
    %1318 = vmatpush1.msra.mxu0 0.0
    %1319 = vmatprep.subr.mxu0 0.0
    %1320 = vmatpush1.msra.mxu0 0.0
    %1321 = vmatprep.subr.mxu0 0.0
    %1322 = vmatpush1.msra.mxu0 0.0
    %1323 = vmatprep.subr.mxu0 0.0
    %1324 = vmatpush1.msra.mxu0 0.0
    %1325 = vmatprep.subr.mxu0 0.0
    %1326 = vmatpush1.msra.mxu0 0.0
    %1327 = vmatprep.subr.mxu0 0.0
    %1328 = vmatpush1.msra.mxu0 0.0
    %1329 = vmatprep.subr.mxu0 0.0
    %1330 = vmatpush1.msra.mxu0 0.0
    %1331 = vmatprep.subr.mxu0 0.0
    %1332 = vmatpush1.msra.mxu0 0.0
    %1333 = vmatprep.subr.mxu0 0.0
    %1334 = vmatpush1.msra.mxu0 0.0
    %1335 = vmatprep.subr.mxu0 0.0
    %1336 = vmatpush1.msra.mxu0 0.0
    %1337 = vmatprep.subr.mxu0 0.0
    %1338 = vmatpush1.msra.mxu0 0.0
    %1339 = vmatprep.subr.mxu0 0.0
    %1340 = vmatpush1.msra.mxu0 0.0
    %1341 = vmatprep.subr.mxu0 0.0
    %1342 = vmatpush1.msra.mxu0 0.0
    %1343 = vmatprep.subr.mxu0 0.0
    %1344 = vmatpush1.msra.mxu0 0.0
    %1345 = vmatprep.subr.mxu0 0.0
    %1346 = vmatpush1.msra.mxu0 0.0
    %1347 = vmatprep.subr.mxu0 0.0
    %1348 = vmatpush1.msra.mxu0 0.0
    %1349 = vmatprep.subr.mxu0 0.0
    %1350 = vmatpush1.msra.mxu0 0.0
    %1351 = vmatprep.subr.mxu0 0.0
    %1352 = vmatpush1.msra.mxu0 0.0
    %1353 = vmatprep.subr.mxu0 0.0
    %1354 = vmatpush1.msra.mxu0 0.0
    %1355 = vmatprep.subr.mxu0 0.0
    %1356 = vmatpush1.msra.mxu0 0.0
    %1357 = vmatprep.mubr.f32.mxu0 0.0
    %1358 = vmatmul.mubr.f32.gmra.mrb[0].mxu0 %v1288
    %v1359 = vpop.f32.mrb[0].mxu0
    %v1360 = vadd.f32 0.0, %v1359
    %v1361 = vpop.f32.mrb[0].mxu0
    %1362 = vdwg.mxu0
    %v1363 = vld [vmem:[#allocation2] sm:$0x1]
    %1365 = vset.pattern.permute.xlu0 0
    %1366 = vperm.xlu0 %1365, %v1363
    %v1367 = vpop.permute.xlu0 %1366
    %v1369 = vlaneseq
    %v1370 = vshrl.u32 %v1369, 7
    %v1371 = vsub.s32 0, %v1370
    %v1372 = vrot.slane %v1367, %v1371
    %v1373 = vadd.f32 %v1360, %v1372
    %v1374 = vxor.u32 %v1373, 2147483648
    %v1375 = vmul.f32 %v1374, 1.442695
    %v1376 = vpow.pop %v1375
    %v1377 = vadd.f32 %v1376, 1.0
    %v1378 = vrcp.pop %v1377
    %v1379 = vmul.f32 1.0, %v1378
    %1380 = vst [vmem:[#allocation3] sm:$0x1] %v1379
    // Predicated region
    $region54: #{tpu_custom_call.1} parent=1 // pred_check
      _
    $region55: #{tpu_custom_call.1} parent=1 // pred_check_branch
      %1382 = sbr.rel (0) target = $region57
    $region56: #{tpu_custom_call.1} parent=1 // pred_region
      %s1384 = ssub.s32 16, 16
      %1385 = vsyncadd [#allocation4], %s1384
      %s1387 = sshll.u32 [#allocation3], 4
      %s1388 = int_to_ptr.vmem [resolvable:$true] %s1387
      %1390 = dma.vmem_to_hbm [thread:$0]  %s1388, 16, %s13, [#allocation4]
    $region57: #{tpu_custom_call.1} parent=1 // pred_fallthru
      _
    // Predicated region
    $region58: #{tpu_custom_call.1} parent=1 // pred_check
      _
    $region59: #{tpu_custom_call.1} parent=1 // pred_check_branch
      %1392 = sbr.rel (0) target = $region61
    $region60: #{tpu_custom_call.1} parent=1 // pred_region
      %1393 = dma.done [#allocation4], 16
    $region61: #{tpu_custom_call.1} parent=1 // pred_fallthru
      _
    %1394 = vsyncpa [#allocation4], 1

</llo_original>
